<compile_context>
chip_gen: v6e
topology: v6e:2x2x1
jax: 0.10.0
libtpu: 0.0.40
codegen_flags: <defaults>
</compile_context>

<pallas_src>
from typing import Optional

import jax
import jax.numpy as jnp
from jax.experimental import pallas as pl
from jax.experimental.pallas import tpu as pltpu


# ----------------------------------------------------------------------------
# Deterministic parameter init (shapes from nn.Linear(2, 2)).
# Intentionally UNUSED in forward, exactly like the PyTorch module.
# ----------------------------------------------------------------------------
def init_params():
    key = jax.random.PRNGKey(42)
    kw, kb = jax.random.split(key)
    w = jax.random.uniform(kw, (2, 2), jnp.float32, minval=-0.5, maxval=0.5)
    b = jax.random.uniform(kb, (2,), jnp.float32, minval=-0.5, maxval=0.5)
    return {"lin_w": w, "lin_b": b}


# ----------------------------------------------------------------------------
# Pallas kernel: element-wise add of the two tiles.
# ----------------------------------------------------------------------------
def _add_kernel(q_ref, c_ref, o_ref):
    o_ref[...] = q_ref[...] + c_ref[...]


# Tuning constants (see header comments).
_SMALL_BYTES = 1 << 20          # <= 1 MiB / operand -> single block, no grid
_TARGET_TILE_BYTES = 4 << 20    # ~4 MiB tiles: DMA time >> 0.35 us/step overhead
_VMEM_LIMIT_BYTES = 32 << 20    # 6 x 4 MiB resident tiles + headroom, OK on all gens


def _lane_dense_view_shape(shape, total):
    """Pick a lane-dense 2D (rows, width) view for an elementwise op."""
    for w in (1024, 512, 256, 128):
        if total % w == 0:
            return total // w, w
    # Cannot make lane-dense; collapse leading dims (width == full last dim,
    # which satisfies the BlockSpec full-extent rule; stores are masked).
    if len(shape) >= 2:
        return total // shape[-1], shape[-1]
    return 1, total


# ----------------------------------------------------------------------------
# Wrapper mirroring DummyDecoder.forward(query_embeddings, candidate_embeddings).
# ----------------------------------------------------------------------------
def dummy_decoder_forward(
    query_embeddings: jax.Array,
    candidate_embeddings: jax.Array,
    params: Optional[dict] = None,  # unused, mirrors the module's unused nn.Linear(2, 2)
) -> jax.Array:
    del params  # self._lin is never used in the PyTorch forward.
    assert query_embeddings.shape == candidate_embeddings.shape
    assert query_embeddings.dtype == candidate_embeddings.dtype

    orig_shape = query_embeddings.shape
    dtype = query_embeddings.dtype
    itemsize = jnp.dtype(dtype).itemsize
    total = int(query_embeddings.size)
    total_bytes = total * itemsize

    # Elementwise op -> a row-major reshape to a lane-dense slab is free.
    rows, width = _lane_dense_view_shape(orig_shape, total)
    q2 = query_embeddings.reshape(rows, width)
    c2 = candidate_embeddings.reshape(rows, width)
    out_shape = jax.ShapeDtypeStruct((rows, width), dtype)

    # ---- Small inputs: one VMEM block each, no grid-loop scaffolding. ----
    if total_bytes <= _SMALL_BYTES or rows <= 8:
        spec = pl.BlockSpec((rows, width), lambda: (0, 0))
        out = pl.pallas_call(
            _add_kernel,
            out_shape=out_shape,
            in_specs=[spec, spec],
            out_specs=spec,
        )(q2, c2)
        return out.reshape(orig_shape)

    # ---- Large inputs: row-tiled, double-buffered, megacore-parallel. ----
    row_bytes = width * itemsize
    block_rows = max(8, (_TARGET_TILE_BYTES // row_bytes) // 8 * 8)
    # Ensure >= 2 grid programs so ("parallel",) can shard across v7x's 2 TCs.
    half_rows = max(8, (-(-rows // 2) + 7) // 8 * 8)  # ceil(rows/2) -> mult of 8
    block_rows = min(block_rows, half_rows, rows)
    if block_rows != rows:
        block_rows = max(8, (block_rows // 8) * 8)

    grid = (pl.cdiv(rows, block_rows),)  # ragged last block handled by Pallas
    spec = pl.BlockSpec((block_rows, width), lambda i: (i, 0))
    out = pl.pallas_call(
        _add_kernel,
        out_shape=out_shape,
        grid=grid,
        in_specs=[spec, spec],
        out_specs=spec,
        compiler_params=pltpu.CompilerParams(
            dimension_semantics=("parallel",),
            vmem_limit_bytes=_VMEM_LIMIT_BYTES,
        ),
    )(q2, c2)
    return out.reshape(orig_shape)


if __name__ == "__main__":
    params = init_params()  # unused by forward, kept to mirror module state

    key = jax.random.PRNGKey(0)
    kq, kc, kq2, kc2 = jax.random.split(key, 4)

    # Small deterministic inputs: batch=8 embeddings of dim=128 (single-block path).
    q = jax.random.normal(kq, (8, 128), dtype=jnp.float32)
    c = jax.random.normal(kc, (8, 128), dtype=jnp.float32)
    out = jax.block_until_ready(dummy_decoder_forward(q, c, params))
    assert out.shape == (8, 128)
    assert jnp.allclose(out, q + c, atol=1e-6), "mismatch vs reference q + c (small)"

    # Moderate input to exercise the tiled / pipelined path (still only 2 MiB/operand).
    qb = jax.random.normal(kq2, (4096, 128), dtype=jnp.float32)
    cb = jax.random.normal(kc2, (4096, 128), dtype=jnp.float32)
    outb = jax.block_until_ready(dummy_decoder_forward(qb, cb, params))
    assert outb.shape == (4096, 128)
    assert jnp.allclose(outb, qb + cb, atol=1e-6), "mismatch vs reference q + c (tiled)"

    print("KERNEL_OK")
</pallas_src>

<mosaic_0001>
module attributes {stable_mosaic.version = 11 : i64} {
  func.func @_add_kernel(%arg0: memref<1x1024xf32, #tpu.memory_space<vmem>>, %arg1: memref<1x1024xf32, #tpu.memory_space<vmem>>, %arg2: memref<1x1024xf32, #tpu.memory_space<vmem>>) attributes {dimension_semantics = [], scalar_prefetch = 0 : i64, scratch_operands = 0 : i64, tpu.core_type = #tpu.core_type<tc>} {
    %c0 = arith.constant 0 : index
    %c0_0 = arith.constant 0 : index
    %0 = vector.load %arg0[%c0, %c0_0] : memref<1x1024xf32, #tpu.memory_space<vmem>>, vector<1x1024xf32>
    %c0_1 = arith.constant 0 : index
    %c0_2 = arith.constant 0 : index
    %1 = vector.load %arg1[%c0_1, %c0_2] : memref<1x1024xf32, #tpu.memory_space<vmem>>, vector<1x1024xf32>
    %2 = arith.addf %0, %1 : vector<1x1024xf32>
    %c0_3 = arith.constant 0 : index
    %c0_4 = arith.constant 0 : index
    %3 = vector.load %arg2[%c0_3, %c0_4] : memref<1x1024xf32, #tpu.memory_space<vmem>>, vector<1x1024xf32>
    tpu.vector_store %arg2[%c0_3, %c0_4], %2 {strides = array<i32>} : memref<1x1024xf32, #tpu.memory_space<vmem>>, vector<1x1024xf32>,
    return
  }
}

</mosaic_0001>

<llo_original>
// kernel: tpu_custom_call.1
$region0: #{tpu_custom_call.1}
  #allocation0 [shape = 'u32[]', space=smem, size = 0x4, offset = 0x4, fixed_abs, tag = 'smem constant byte address 0x4 - core index']
  #allocation1 [shape = 'u32[144,128]{1,0:T(1,128)}', space=vmem, size = 0x12000, scoped, tag = 'internal scratch']
  %s0 = inlined_call_operand.hbm [shape: f32[1,1024], index: 0, kind: input, shape index: {}]
  %s1 = inlined_call_operand.hbm [shape: f32[1,1024], index: 1, kind: input, shape index: {}]
  %s2 = inlined_call_operand.hbm [shape: f32[1,1024], index: 2, kind: output, shape index: {}]
  %s3 = sld [smem:[#allocation0]]
  $region26: #{tpu_custom_call.1} parent=0
    _
  %s5 = ssub.s32 1, %s3
  %s6 = scalar_select 0, %s5, %s3
  $region1: #{tpu_custom_call.1} parent=0
    #allocation2 [shape = 'u8[4096]{0}', space=vmem, size = 0x1000, scoped, tag = 'input window, operand 0, single buffered']
    #allocation3 [shape = 's32[1]{0}', space=sflag, size = 0x4, scoped, tag = 'scoped memory for tpu_custom_call.1']
    #allocation4 [shape = 's32[1]{0}', space=sflag, size = 0x4, scoped, tag = 'scoped memory for tpu_custom_call.1']
    #allocation5 [shape = 'u8[4096]{0}', space=vmem, size = 0x1000, scoped, tag = 'input window, operand 1, single buffered']
    #allocation6 [shape = 's32[1]{0}', space=sflag, size = 0x4, scoped, tag = 'scoped memory for tpu_custom_call.1']
    #allocation7 [shape = 'u8[4096]{0}', space=vmem, size = 0x1000, scoped, tag = 'output window, operand 0, single buffered']
    %7 = vsyncpa [#allocation3], 0
    %8 = vsyncpa [#allocation6], 0
    %9 = vsyncpa [#allocation4], 0
    // Predicated region
    $region2: #{tpu_custom_call.1} parent=1 // pred_check
      _
    $region3: #{tpu_custom_call.1} parent=1 // pred_check_branch
      %11 = sbr.rel (0) target = $region5
    $region4: #{tpu_custom_call.1} parent=1 // pred_region
      %s13 = ssub.s32 128, 128
      %14 = vsyncadd [#allocation3], %s13
      %s16 = sshll.u32 [#allocation2], 4
      %s17 = int_to_ptr.vmem [resolvable:$true] %s16
      %19 = dma.hbm_to_vmem [thread:$0]  %s0, 128, %s17, [#allocation3]
    $region5: #{tpu_custom_call.1} parent=1 // pred_fallthru
      _
    // Predicated region
    $region6: #{tpu_custom_call.1} parent=1 // pred_check
      _
    $region7: #{tpu_custom_call.1} parent=1 // pred_check_branch
      %21 = sbr.rel (0) target = $region9
    $region8: #{tpu_custom_call.1} parent=1 // pred_region
      %s23 = ssub.s32 128, 128
      %24 = vsyncadd [#allocation6], %s23
      %s26 = sshll.u32 [#allocation5], 4
      %s27 = int_to_ptr.vmem [resolvable:$true] %s26
      %29 = dma.hbm_to_vmem [thread:$0]  %s1, 128, %s27, [#allocation6]
    $region9: #{tpu_custom_call.1} parent=1 // pred_fallthru
      _
    // Predicated region
    $region10: #{tpu_custom_call.1} parent=1 // pred_check
      _
    $region11: #{tpu_custom_call.1} parent=1 // pred_check_branch
      %31 = sbr.rel (0) target = $region13
    $region12: #{tpu_custom_call.1} parent=1 // pred_region
      %32 = dma.done [#allocation3], 128
    $region13: #{tpu_custom_call.1} parent=1 // pred_fallthru
      _
    // Predicated region
    $region14: #{tpu_custom_call.1} parent=1 // pred_check
      _
    $region15: #{tpu_custom_call.1} parent=1 // pred_check_branch
      %34 = sbr.rel (0) target = $region17
    $region16: #{tpu_custom_call.1} parent=1 // pred_region
      %35 = dma.done [#allocation6], 128
    $region17: #{tpu_custom_call.1} parent=1 // pred_fallthru
      _
    %v36 = vld [vmem:[#allocation2] sm:$0xff]
    %v37 = vld [vmem:[#allocation5] sm:$0xff]
    %v38 = vadd.f32 %v36, %v37
    %39 = vst [vmem:[#allocation7] sm:$0xff] %v38
    // Predicated region
    $region18: #{tpu_custom_call.1} parent=1 // pred_check
      _
    $region19: #{tpu_custom_call.1} parent=1 // pred_check_branch
      %41 = sbr.rel (0) target = $region21
    $region20: #{tpu_custom_call.1} parent=1 // pred_region
      %s43 = ssub.s32 128, 128
      %44 = vsyncadd [#allocation4], %s43
      %s46 = sshll.u32 [#allocation7], 4
      %s47 = int_to_ptr.vmem [resolvable:$true] %s46
      %49 = dma.vmem_to_hbm [thread:$0]  %s47, 128, %s2, [#allocation4]
    $region21: #{tpu_custom_call.1} parent=1 // pred_fallthru
      _
    // Predicated region
    $region22: #{tpu_custom_call.1} parent=1 // pred_check
      _
    $region23: #{tpu_custom_call.1} parent=1 // pred_check_branch
      %51 = sbr.rel (0) target = $region25
    $region24: #{tpu_custom_call.1} parent=1 // pred_region
      %52 = dma.done [#allocation4], 128
    $region25: #{tpu_custom_call.1} parent=1 // pred_fallthru
      _
    %53 = vsyncpa [#allocation3], 1
    %54 = vsyncpa [#allocation6], 1
    %55 = vsyncpa [#allocation4], 1

</llo_original>
